<compile_context>
chip_gen: v5e
topology: v5e:2x2
jax: 0.10.0
libtpu: 0.0.40
codegen_flags: <defaults>
</compile_context>

<pallas_src>
import functools

import jax
import jax.numpy as jnp
import numpy as np
from jax import lax
from jax.experimental import pallas as pl
from jax.experimental.pallas import tpu as pltpu


def _conv_cat_kernel(x_ref, w_ref, b_ref, o_ref, *, W, K):
    """Fused conv(k=K,'same') + ReLU + channel-concat for one image.

    x_ref: (1, Cin, HW + 2*smax)  zero-padded, spatially-flattened input
    w_ref: (K*K, Cout, Cin)       taps ordered kh*K + kw
    b_ref: (Cout, 1)
    o_ref: (1, Cin + Cout, HW)    rows [:Cin] = x, rows [Cin:] = relu(conv(x))
    """
    Cin = x_ref.shape[1]
    Cout = b_ref.shape[0]
    HW = o_ref.shape[2]
    pad = K // 2
    smax = pad * W + pad

    xe = x_ref[0]                        # (Cin, HW + 2*smax)
    x_center = xe[:, smax:smax + HW]     # the original image, flattened

    # Column index of each flattened-output lane; masks the lanes where a
    # horizontal shift would wrap into the neighbouring row. Built once
    # (trace-time loop), reused by every kh for the same dw.
    col = lax.broadcasted_iota(jnp.int32, (1, HW), 1) % W
    col_masks = {}
    for dw in range(-pad, pad + 1):
        if dw != 0:
            col_masks[dw] = (col + dw >= 0) & (col + dw < W)

    # Accumulator starts as the broadcast bias (saves a separate add pass).
    acc = jnp.broadcast_to(b_ref[...].astype(jnp.float32), (Cout, HW))

    # K*K taps: each is a static lane-shifted view of the padded flat image
    # (vertical out-of-range rows land in the zero padding; horizontal wrap is
    # masked on the VPU), contracted against a (Cout, Cin) weight slice on the
    # MXU with an f32 accumulator.
    for kh in range(K):
        dh = kh - pad
        for kw in range(K):
            dw = kw - pad
            off = smax + dh * W + dw
            tap = x_center if (dh == 0 and dw == 0) else xe[:, off:off + HW]
            if dw != 0:
                tap = jnp.where(col_masks[dw], tap, 0.0)
            acc = acc + jnp.dot(w_ref[kh * K + kw], tap,
                                preferred_element_type=jnp.float32)

    conv = jnp.maximum(acc, 0.0)         # fused ReLU

    # Fused channel concat: passthrough + conv result, lane-dense (HW lanes).
    o_ref[0, :Cin, :] = x_center.astype(o_ref.dtype)
    o_ref[0, Cin:, :] = conv.astype(o_ref.dtype)


@functools.partial(jax.jit, static_argnames=("ksize",))
def conv_cat_forward(x_nchw, weight_oihw, bias, ksize=3):
    """PyTorch-equivalent forward: cat([x, relu(conv2d(x))], dim=1), NCHW in/out."""
    if ksize % 2 != 1:
        raise ValueError("ksize must be odd to match PyTorch pad=k//2 'same' conv.")
    N, Cin, H, W = x_nchw.shape
    Cout = weight_oihw.shape[0]
    K = ksize
    pad = K // 2
    HW = H * W
    smax = pad * W + pad

    # Flatten spatial dims (contiguous, free) and zero-pad the flat axis so every
    # conv tap becomes a static in-bounds lane shift inside the kernel.
    x_flat = x_nchw.reshape(N, Cin, HW)
    x_ext = jnp.pad(x_flat, ((0, 0), (0, 0), (smax, smax)))

    # PyTorch weight (Cout, Cin, K, K) -> compact tap-major slab (K*K, Cout, Cin).
    w_taps = jnp.transpose(weight_oihw, (2, 3, 0, 1)).reshape(K * K, Cout, Cin)
    b2 = bias.reshape(Cout, 1)

    kernel = functools.partial(_conv_cat_kernel, W=W, K=K)
    out_flat = pl.pallas_call(
        kernel,
        out_shape=jax.ShapeDtypeStruct((N, Cin + Cout, HW), x_nchw.dtype),
        grid_spec=pltpu.PrefetchScalarGridSpec(
            num_scalar_prefetch=0,
            grid=(N,),
            in_specs=[
                pl.BlockSpec((1, Cin, HW + 2 * smax), lambda n: (n, 0, 0)),
                pl.BlockSpec((K * K, Cout, Cin), lambda n: (0, 0, 0)),
                pl.BlockSpec((Cout, 1), lambda n: (0, 0)),
            ],
            out_specs=pl.BlockSpec((1, Cin + Cout, HW), lambda n: (n, 0, 0)),
        ),
        compiler_params=pltpu.CompilerParams(
            dimension_semantics=("parallel",)),
    )(x_ext, w_taps, b2)

    return out_flat.reshape(N, Cin + Cout, H, W)


def _reference(x_nchw, weight_oihw, bias, ksize=3):
    pad = ksize // 2
    out = lax.conv_general_dilated(
        x_nchw, weight_oihw,
        window_strides=(1, 1), padding=((pad, pad), (pad, pad)),
        dimension_numbers=("NCHW", "OIHW", "NCHW"))
    out = jnp.maximum(out + bias[None, :, None, None], 0.0)
    return jnp.concatenate([x_nchw, out], axis=1)


if __name__ == "__main__":
    N, Cin, H, W = 2, 4, 16, 16
    Cout, K = 8, 3

    key = jax.random.PRNGKey(0)
    kx, kw_, kb = jax.random.split(key, 3)
    x = jax.random.normal(kx, (N, Cin, H, W), dtype=jnp.float32)
    # Deterministic parameter init (kaiming-uniform-like scale).
    fan_in = Cin * K * K
    bound = 1.0 / np.sqrt(fan_in)
    weight = jax.random.uniform(kw_, (Cout, Cin, K, K), jnp.float32, -bound, bound)
    bias = jax.random.uniform(kb, (Cout,), jnp.float32, -bound, bound)

    out = jax.block_until_ready(conv_cat_forward(x, weight, bias, ksize=K))
    ref = jax.block_until_ready(_reference(x, weight, bias, ksize=K))

    assert out.shape == (N, Cin + Cout, H, W), out.shape
    np.testing.assert_allclose(np.asarray(out), np.asarray(ref), rtol=1e-5, atol=1e-5)

    print("KERNEL_OK")
</pallas_src>

<mosaic_0001>
module attributes {stable_mosaic.version = 11 : i64} {
  func.func @_conv_cat_kernel(%arg0: i32, %arg1: memref<1x4x290xf32, #tpu.memory_space<vmem>>, %arg2: memref<9x8x4xf32, #tpu.memory_space<vmem>>, %arg3: memref<8x1xf32, #tpu.memory_space<vmem>>, %arg4: memref<1x12x256xf32, #tpu.memory_space<vmem>>) attributes {dimension_semantics = [#tpu.dimension_semantics<parallel>], iteration_bounds = array<i64: 2>, scalar_prefetch = 0 : i64, scratch_operands = 0 : i64, tpu.core_type = #tpu.core_type<tc>, window_params = [{transform_indices = @transform_0, window_bounds = array<i64: 1, 4, 290>}, {pipeline_mode = #tpu.pipeline_mode<synchronous>, transform_indices = @transform_1, window_bounds = array<i64: 9, 8, 4>}, {pipeline_mode = #tpu.pipeline_mode<synchronous>, transform_indices = @transform_2, window_bounds = array<i64: 8, 1>}, {transform_indices = @transform_3, window_bounds = array<i64: 1, 12, 256>}]} {
    %c0 = arith.constant 0 : index
    %c0_0 = arith.constant 0 : index
    %c0_1 = arith.constant 0 : index
    %0 = vector.load %arg1[%c0, %c0_0, %c0_1] : memref<1x4x290xf32, #tpu.memory_space<vmem>>, vector<1x4x290xf32>
    %1 = vector.shape_cast %0 : vector<1x4x290xf32> to vector<4x290xf32>
    %2 = vector.extract_strided_slice %1 {offsets = [0, 17], sizes = [4, 256], strides = [1, 1]} : vector<4x290xf32> to vector<4x256xf32>
    %3 = tpu.iota {dimensions = array<i32: 1>} : vector<1x256xi32>
    %c16_i32 = arith.constant 16 : i32
    %c0_i32 = arith.constant 0 : i32
    %4 = arith.cmpi eq, %c16_i32, %c0_i32 : i32
    %c1_i32 = arith.constant 1 : i32
    %5 = arith.select %4, %c1_i32, %c16_i32 : i32
    %6 = vector.broadcast %5 : i32 to vector<1x256xi32>
    %7 = arith.remsi %3, %6 : vector<1x256xi32>
    %c0_i32_2 = arith.constant 0 : i32
    %8 = vector.broadcast %c0_i32_2 : i32 to vector<1x256xi32>
    %9 = arith.cmpi ne, %7, %8 : vector<1x256xi32>
    %c0_i32_3 = arith.constant 0 : i32
    %10 = vector.broadcast %c0_i32_3 : i32 to vector<1x256xi32>
    %11 = arith.cmpi slt, %7, %10 : vector<1x256xi32>
    %c0_i32_4 = arith.constant 0 : i32
    %12 = arith.cmpi slt, %5, %c0_i32_4 : i32
    %13 = vector.broadcast %12 : i1 to vector<1x256xi1>
    %14 = vector.broadcast %13 : vector<1x256xi1> to vector<1x256xi1>
    %15 = arith.xori %11, %14 : vector<1x256xi1>
    %16 = arith.andi %15, %9 : vector<1x256xi1>
    %17 = vector.broadcast %5 : i32 to vector<1x256xi32>
    %18 = arith.addi %7, %17 : vector<1x256xi32>
    %19 = arith.select %16, %18, %7 : vector<1x256xi1>, vector<1x256xi32>
    %c-1_i32 = arith.constant -1 : i32
    %20 = vector.broadcast %c-1_i32 : i32 to vector<1x256xi32>
    %21 = arith.addi %19, %20 : vector<1x256xi32>
    %c0_i32_5 = arith.constant 0 : i32
    %22 = vector.broadcast %c0_i32_5 : i32 to vector<1x256xi32>
    %23 = arith.cmpi sge, %21, %22 : vector<1x256xi32>
    %c-1_i32_6 = arith.constant -1 : i32
    %24 = vector.broadcast %c-1_i32_6 : i32 to vector<1x256xi32>
    %25 = arith.addi %19, %24 : vector<1x256xi32>
    %c16_i32_7 = arith.constant 16 : i32
    %26 = vector.broadcast %c16_i32_7 : i32 to vector<1x256xi32>
    %27 = arith.cmpi slt, %25, %26 : vector<1x256xi32>
    %28 = arith.andi %23, %27 : vector<1x256xi1>
    %c1_i32_8 = arith.constant 1 : i32
    %29 = vector.broadcast %c1_i32_8 : i32 to vector<1x256xi32>
    %30 = arith.addi %19, %29 : vector<1x256xi32>
    %c0_i32_9 = arith.constant 0 : i32
    %31 = vector.broadcast %c0_i32_9 : i32 to vector<1x256xi32>
    %32 = arith.cmpi sge, %30, %31 : vector<1x256xi32>
    %c1_i32_10 = arith.constant 1 : i32
    %33 = vector.broadcast %c1_i32_10 : i32 to vector<1x256xi32>
    %34 = arith.addi %19, %33 : vector<1x256xi32>
    %c16_i32_11 = arith.constant 16 : i32
    %35 = vector.broadcast %c16_i32_11 : i32 to vector<1x256xi32>
    %36 = arith.cmpi slt, %34, %35 : vector<1x256xi32>
    %37 = arith.andi %32, %36 : vector<1x256xi1>
    %c0_12 = arith.constant 0 : index
    %c0_13 = arith.constant 0 : index
    %38 = vector.load %arg3[%c0_12, %c0_13] : memref<8x1xf32, #tpu.memory_space<vmem>>, vector<8x1xf32>
    %39 = vector.shape_cast %38 : vector<8x1xf32> to vector<8x1xf32>
    %40 = vector.broadcast %39 : vector<8x1xf32> to vector<8x256xf32>
    %41 = vector.extract_strided_slice %1 {offsets = [0, 0], sizes = [4, 256], strides = [1, 1]} : vector<4x290xf32> to vector<4x256xf32>
    %cst = arith.constant 0.000000e+00 : f32
    %42 = vector.shape_cast %28 : vector<1x256xi1> to vector<1x256xi1>
    %43 = vector.broadcast %42 : vector<1x256xi1> to vector<4x256xi1>
    %44 = vector.broadcast %cst : f32 to vector<4x256xf32>
    %45 = arith.select %43, %41, %44 : vector<4x256xi1>, vector<4x256xf32>
    %c0_14 = arith.constant 0 : index
    %c0_15 = arith.constant 0 : index
    %c0_16 = arith.constant 0 : index
    %46 = vector.load %arg2[%c0_14, %c0_15, %c0_16] : memref<9x8x4xf32, #tpu.memory_space<vmem>>, vector<1x8x4xf32>
    %47 = vector.shape_cast %46 : vector<1x8x4xf32> to vector<8x4xf32>
    %cst_17 = arith.constant dense<0.000000e+00> : vector<8x256xf32>
    %48 = tpu.matmul %47, %45, %cst_17 {dimension_numbers = #tpu.dot_dimension_numbers<[1], [0], [0], [1], [0, 0, 1, 1], [], []>} : vector<8x4xf32>, vector<4x256xf32>, vector<8x256xf32> -> vector<8x256xf32>
    %49 = arith.addf %40, %48 : vector<8x256xf32>
    %50 = vector.extract_strided_slice %1 {offsets = [0, 1], sizes = [4, 256], strides = [1, 1]} : vector<4x290xf32> to vector<4x256xf32>
    %c1 = arith.constant 1 : index
    %c0_18 = arith.constant 0 : index
    %c0_19 = arith.constant 0 : index
    %51 = vector.load %arg2[%c1, %c0_18, %c0_19] : memref<9x8x4xf32, #tpu.memory_space<vmem>>, vector<1x8x4xf32>
    %52 = vector.shape_cast %51 : vector<1x8x4xf32> to vector<8x4xf32>
    %cst_20 = arith.constant dense<0.000000e+00> : vector<8x256xf32>
    %53 = tpu.matmul %52, %50, %cst_20 {dimension_numbers = #tpu.dot_dimension_numbers<[1], [0], [0], [1], [0, 0, 1, 1], [], []>} : vector<8x4xf32>, vector<4x256xf32>, vector<8x256xf32> -> vector<8x256xf32>
    %54 = arith.addf %49, %53 : vector<8x256xf32>
    %55 = vector.extract_strided_slice %1 {offsets = [0, 2], sizes = [4, 256], strides = [1, 1]} : vector<4x290xf32> to vector<4x256xf32>
    %cst_21 = arith.constant 0.000000e+00 : f32
    %56 = vector.shape_cast %37 : vector<1x256xi1> to vector<1x256xi1>
    %57 = vector.broadcast %56 : vector<1x256xi1> to vector<4x256xi1>
    %58 = vector.broadcast %cst_21 : f32 to vector<4x256xf32>
    %59 = arith.select %57, %55, %58 : vector<4x256xi1>, vector<4x256xf32>
    %c2 = arith.constant 2 : index
    %c0_22 = arith.constant 0 : index
    %c0_23 = arith.constant 0 : index
    %60 = vector.load %arg2[%c2, %c0_22, %c0_23] : memref<9x8x4xf32, #tpu.memory_space<vmem>>, vector<1x8x4xf32>
    %61 = vector.shape_cast %60 : vector<1x8x4xf32> to vector<8x4xf32>
    %cst_24 = arith.constant dense<0.000000e+00> : vector<8x256xf32>
    %62 = tpu.matmul %61, %59, %cst_24 {dimension_numbers = #tpu.dot_dimension_numbers<[1], [0], [0], [1], [0, 0, 1, 1], [], []>} : vector<8x4xf32>, vector<4x256xf32>, vector<8x256xf32> -> vector<8x256xf32>
    %63 = arith.addf %54, %62 : vector<8x256xf32>
    %64 = vector.extract_strided_slice %1 {offsets = [0, 16], sizes = [4, 256], strides = [1, 1]} : vector<4x290xf32> to vector<4x256xf32>
    %cst_25 = arith.constant 0.000000e+00 : f32
    %65 = vector.shape_cast %28 : vector<1x256xi1> to vector<1x256xi1>
    %66 = vector.broadcast %65 : vector<1x256xi1> to vector<4x256xi1>
    %67 = vector.broadcast %cst_25 : f32 to vector<4x256xf32>
    %68 = arith.select %66, %64, %67 : vector<4x256xi1>, vector<4x256xf32>
    %c3 = arith.constant 3 : index
    %c0_26 = arith.constant 0 : index
    %c0_27 = arith.constant 0 : index
    %69 = vector.load %arg2[%c3, %c0_26, %c0_27] : memref<9x8x4xf32, #tpu.memory_space<vmem>>, vector<1x8x4xf32>
    %70 = vector.shape_cast %69 : vector<1x8x4xf32> to vector<8x4xf32>
    %cst_28 = arith.constant dense<0.000000e+00> : vector<8x256xf32>
    %71 = tpu.matmul %70, %68, %cst_28 {dimension_numbers = #tpu.dot_dimension_numbers<[1], [0], [0], [1], [0, 0, 1, 1], [], []>} : vector<8x4xf32>, vector<4x256xf32>, vector<8x256xf32> -> vector<8x256xf32>
    %72 = arith.addf %63, %71 : vector<8x256xf32>
    %c4 = arith.constant 4 : index
    %c0_29 = arith.constant 0 : index
    %c0_30 = arith.constant 0 : index
    %73 = vector.load %arg2[%c4, %c0_29, %c0_30] : memref<9x8x4xf32, #tpu.memory_space<vmem>>, vector<1x8x4xf32>
    %74 = vector.shape_cast %73 : vector<1x8x4xf32> to vector<8x4xf32>
    %cst_31 = arith.constant dense<0.000000e+00> : vector<8x256xf32>
    %75 = tpu.matmul %74, %2, %cst_31 {dimension_numbers = #tpu.dot_dimension_numbers<[1], [0], [0], [1], [0, 0, 1, 1], [], []>} : vector<8x4xf32>, vector<4x256xf32>, vector<8x256xf32> -> vector<8x256xf32>
    %76 = arith.addf %72, %75 : vector<8x256xf32>
    %77 = vector.extract_strided_slice %1 {offsets = [0, 18], sizes = [4, 256], strides = [1, 1]} : vector<4x290xf32> to vector<4x256xf32>
    %cst_32 = arith.constant 0.000000e+00 : f32
    %78 = vector.shape_cast %37 : vector<1x256xi1> to vector<1x256xi1>
    %79 = vector.broadcast %78 : vector<1x256xi1> to vector<4x256xi1>
    %80 = vector.broadcast %cst_32 : f32 to vector<4x256xf32>
    %81 = arith.select %79, %77, %80 : vector<4x256xi1>, vector<4x256xf32>
    %c5 = arith.constant 5 : index
    %c0_33 = arith.constant 0 : index
    %c0_34 = arith.constant 0 : index
    %82 = vector.load %arg2[%c5, %c0_33, %c0_34] : memref<9x8x4xf32, #tpu.memory_space<vmem>>, vector<1x8x4xf32>
    %83 = vector.shape_cast %82 : vector<1x8x4xf32> to vector<8x4xf32>
    %cst_35 = arith.constant dense<0.000000e+00> : vector<8x256xf32>
    %84 = tpu.matmul %83, %81, %cst_35 {dimension_numbers = #tpu.dot_dimension_numbers<[1], [0], [0], [1], [0, 0, 1, 1], [], []>} : vector<8x4xf32>, vector<4x256xf32>, vector<8x256xf32> -> vector<8x256xf32>
    %85 = arith.addf %76, %84 : vector<8x256xf32>
    %86 = vector.extract_strided_slice %1 {offsets = [0, 32], sizes = [4, 256], strides = [1, 1]} : vector<4x290xf32> to vector<4x256xf32>
    %cst_36 = arith.constant 0.000000e+00 : f32
    %87 = vector.shape_cast %28 : vector<1x256xi1> to vector<1x256xi1>
    %88 = vector.broadcast %87 : vector<1x256xi1> to vector<4x256xi1>
    %89 = vector.broadcast %cst_36 : f32 to vector<4x256xf32>
    %90 = arith.select %88, %86, %89 : vector<4x256xi1>, vector<4x256xf32>
    %c6 = arith.constant 6 : index
    %c0_37 = arith.constant 0 : index
    %c0_38 = arith.constant 0 : index
    %91 = vector.load %arg2[%c6, %c0_37, %c0_38] : memref<9x8x4xf32, #tpu.memory_space<vmem>>, vector<1x8x4xf32>
    %92 = vector.shape_cast %91 : vector<1x8x4xf32> to vector<8x4xf32>
    %cst_39 = arith.constant dense<0.000000e+00> : vector<8x256xf32>
    %93 = tpu.matmul %92, %90, %cst_39 {dimension_numbers = #tpu.dot_dimension_numbers<[1], [0], [0], [1], [0, 0, 1, 1], [], []>} : vector<8x4xf32>, vector<4x256xf32>, vector<8x256xf32> -> vector<8x256xf32>
    %94 = arith.addf %85, %93 : vector<8x256xf32>
    %95 = vector.extract_strided_slice %1 {offsets = [0, 33], sizes = [4, 256], strides = [1, 1]} : vector<4x290xf32> to vector<4x256xf32>
    %c7 = arith.constant 7 : index
    %c0_40 = arith.constant 0 : index
    %c0_41 = arith.constant 0 : index
    %96 = vector.load %arg2[%c7, %c0_40, %c0_41] : memref<9x8x4xf32, #tpu.memory_space<vmem>>, vector<1x8x4xf32>
    %97 = vector.shape_cast %96 : vector<1x8x4xf32> to vector<8x4xf32>
    %cst_42 = arith.constant dense<0.000000e+00> : vector<8x256xf32>
    %98 = tpu.matmul %97, %95, %cst_42 {dimension_numbers = #tpu.dot_dimension_numbers<[1], [0], [0], [1], [0, 0, 1, 1], [], []>} : vector<8x4xf32>, vector<4x256xf32>, vector<8x256xf32> -> vector<8x256xf32>
    %99 = arith.addf %94, %98 : vector<8x256xf32>
    %100 = vector.extract_strided_slice %1 {offsets = [0, 34], sizes = [4, 256], strides = [1, 1]} : vector<4x290xf32> to vector<4x256xf32>
    %cst_43 = arith.constant 0.000000e+00 : f32
    %101 = vector.shape_cast %37 : vector<1x256xi1> to vector<1x256xi1>
    %102 = vector.broadcast %101 : vector<1x256xi1> to vector<4x256xi1>
    %103 = vector.broadcast %cst_43 : f32 to vector<4x256xf32>
    %104 = arith.select %102, %100, %103 : vector<4x256xi1>, vector<4x256xf32>
    %c8 = arith.constant 8 : index
    %c0_44 = arith.constant 0 : index
    %c0_45 = arith.constant 0 : index
    %105 = vector.load %arg2[%c8, %c0_44, %c0_45] : memref<9x8x4xf32, #tpu.memory_space<vmem>>, vector<1x8x4xf32>
    %106 = vector.shape_cast %105 : vector<1x8x4xf32> to vector<8x4xf32>
    %cst_46 = arith.constant dense<0.000000e+00> : vector<8x256xf32>
    %107 = tpu.matmul %106, %104, %cst_46 {dimension_numbers = #tpu.dot_dimension_numbers<[1], [0], [0], [1], [0, 0, 1, 1], [], []>} : vector<8x4xf32>, vector<4x256xf32>, vector<8x256xf32> -> vector<8x256xf32>
    %108 = arith.addf %99, %107 : vector<8x256xf32>
    %cst_47 = arith.constant 0.000000e+00 : f32
    %109 = vector.broadcast %cst_47 : f32 to vector<8x256xf32>
    %110 = arith.maximumf %108, %109 : vector<8x256xf32>
    %c0_48 = arith.constant 0 : index
    %c0_49 = arith.constant 0 : index
    %c0_50 = arith.constant 0 : index
    %111 = vector.load %arg4[%c0_48, %c0_49, %c0_50] : memref<1x12x256xf32, #tpu.memory_space<vmem>>, vector<1x4x256xf32>
    %112 = vector.shape_cast %111 : vector<1x4x256xf32> to vector<4x256xf32>
    %113 = vector.shape_cast %2 : vector<4x256xf32> to vector<1x4x256xf32>
    tpu.vector_store %arg4[%c0_48, %c0_49, %c0_50], %113 {strides = array<i32>} : memref<1x12x256xf32, #tpu.memory_space<vmem>>, vector<1x4x256xf32>,
    %c0_51 = arith.constant 0 : index
    %c4_52 = arith.constant 4 : index
    %c0_53 = arith.constant 0 : index
    %114 = vector.load %arg4[%c0_51, %c4_52, %c0_53] : memref<1x12x256xf32, #tpu.memory_space<vmem>>, vector<1x8x256xf32>
    %115 = vector.shape_cast %114 : vector<1x8x256xf32> to vector<8x256xf32>
    %116 = vector.shape_cast %110 : vector<8x256xf32> to vector<1x8x256xf32>
    tpu.vector_store %arg4[%c0_51, %c4_52, %c0_53], %116 {strides = array<i32>} : memref<1x12x256xf32, #tpu.memory_space<vmem>>, vector<1x8x256xf32>,
    return
  }
  func.func @transform_0(%arg0: i32) -> (i32, i32, i32) {
    %c0_i32 = arith.constant 0 : i32
    %c0_i32_0 = arith.constant 0 : i32
    %c0_i32_1 = arith.constant 0 : i32
    return %arg0, %c0_i32, %c0_i32_0 : i32, i32, i32
  }
  func.func @transform_1(%arg0: i32) -> (i32, i32, i32) {
    %c0_i32 = arith.constant 0 : i32
    %c0_i32_0 = arith.constant 0 : i32
    %c0_i32_1 = arith.constant 0 : i32
    %c0_i32_2 = arith.constant 0 : i32
    return %c0_i32, %c0_i32_0, %c0_i32_1 : i32, i32, i32
  }
  func.func @transform_2(%arg0: i32) -> (i32, i32) {
    %c0_i32 = arith.constant 0 : i32
    %c0_i32_0 = arith.constant 0 : i32
    %c0_i32_1 = arith.constant 0 : i32
    return %c0_i32, %c0_i32_0 : i32, i32
  }
  func.func @transform_3(%arg0: i32) -> (i32, i32, i32) {
    %c0_i32 = arith.constant 0 : i32
    %c0_i32_0 = arith.constant 0 : i32
    %c0_i32_1 = arith.constant 0 : i32
    return %arg0, %c0_i32, %c0_i32_0 : i32, i32, i32
  }
}

</mosaic_0001>

<llo_original>
// kernel: conv_cat_forward.1
$region0: #{conv_cat_forward.1}
  #allocation0 [shape = 'u32[]', space=smem, size = 0x4, offset = 0x4, fixed_abs, tag = 'smem constant byte address 0x4 - core index']
  #allocation1 [shape = 'u32[72,128]{1,0:T(1,128)}', space=vmem, size = 0x9000, scoped, tag = 'internal scratch']
  %s0 = inlined_call_operand.vmem [shape: f32[2,4,290], index: 0, kind: input, shape index: {}]
  %s1 = inlined_call_operand.vmem [shape: f32[9,8,4], index: 1, kind: input, shape index: {}]
  %s2 = inlined_call_operand.vmem [shape: f32[8,1], index: 2, kind: input, shape index: {}]
  %s3 = inlined_call_operand.vmem [shape: f32[2,12,256], index: 3, kind: output, shape index: {}]
  %s4 = sld [smem:[#allocation0]]
  $region45: #{conv_cat_forward.1} parent=0
    _
  %s6 = ssub.s32 1, %s4
  %s7 = scalar_select 0, %s6, %s4
  loop: start=0, step=1, limit=4
  $region2: #{conv_cat_forward.1} parent=0 // loop_pre_header
    _
  $region3: #{conv_cat_forward.1} parent=0 // loop_header
    %s9 = sphi 0, %s13
    %p10 = scmp.ge.s32.totalorder %s9, 4
    %s19 = sphi 0, %s21
    %s22 = sphi 0, %s19
    %s23 = sphi 0, %s22
    %s39 = sphi 0, %s23
    %s43 = sphi 0, %s43
    %s45 = sphi 0, %s43
    %s46 = sphi 0, %s45
    %s60 = sphi 0, %s46
    %s64 = sphi 0, %s64
    %s66 = sphi 0, %s64
    %s67 = sphi 0, %s66
    %s81 = sphi 0, %s67
    %s87 = sphi 0, %s89
    %s90 = sphi 0, %s87
    %s91 = sphi 0, %s90
    %s107 = sphi 0, %s91
  $region4: #{conv_cat_forward.1} parent=0 // loop_header_branch
    %12 = sbr.rel (%p10) target = $region8
  $region5: #{conv_cat_forward.1} parent=0 // loop_body
    %s14 = ssub.s32 %s9, 1
    %s15 = ssub.s32 %s9, 2
    %s16 = sadd.s32 %s9, 1
    %s17 = ssub.s32 %s9, %s16
    %p18 = scmp.eq.s32.totalorder %s17, 0
    %s20 = sadd.s32 %s19, 1
    %s21 = scalar_select %p18, %s19, %s20
    %p24 = pneg %p18
    %p25 = scmp.eq.s32.totalorder %s9, 1
    %p26 = por %p24, %p25
    %p27 = scmp.ne.s32.totalorder %s19, %s22
    %p28 = scmp.eq.s32.totalorder %s9, 0
    %p29 = por %p27, %p28
    %p30 = scmp.ne.s32.totalorder %s19, %s22
    %p31 = scmp.eq.s32.totalorder %s14, 1
    %p32 = por %p30, %p31
    %p33 = scmp.ne.s32.totalorder %s22, %s23
    %p34 = scmp.eq.s32.totalorder %s14, 0
    %p35 = por %p33, %p34
    %p36 = scmp.ne.s32.totalorder %s22, %s23
    %p37 = scmp.eq.s32.totalorder %s15, 1
    %p38 = por %p36, %p37
    %p40 = scmp.ne.s32.totalorder %s23, %s39
    %p41 = scmp.eq.s32.totalorder %s15, 0
    %p42 = por %p40, %p41
    %s44 = sadd.s32 %s43, 1
    %p47 = scmp.eq.s32.totalorder %s9, 1
    %p48 = scmp.ne.s32.totalorder %s43, %s45
    %p49 = scmp.eq.s32.totalorder %s9, 0
    %p50 = por %p48, %p49
    %p51 = scmp.ne.s32.totalorder %s43, %s45
    %p52 = scmp.eq.s32.totalorder %s14, 1
    %p53 = por %p51, %p52
    %p54 = scmp.ne.s32.totalorder %s45, %s46
    %p55 = scmp.eq.s32.totalorder %s14, 0
    %p56 = por %p54, %p55
    %p57 = scmp.ne.s32.totalorder %s45, %s46
    %p58 = scmp.eq.s32.totalorder %s15, 1
    %p59 = por %p57, %p58
    %p61 = scmp.ne.s32.totalorder %s46, %s60
    %p62 = scmp.eq.s32.totalorder %s15, 0
    %p63 = por %p61, %p62
    %s65 = sadd.s32 %s64, 1
    %p68 = scmp.eq.s32.totalorder %s9, 1
    %p69 = scmp.ne.s32.totalorder %s64, %s66
    %p70 = scmp.eq.s32.totalorder %s9, 0
    %p71 = por %p69, %p70
    %p72 = scmp.ne.s32.totalorder %s64, %s66
    %p73 = scmp.eq.s32.totalorder %s14, 1
    %p74 = por %p72, %p73
    %p75 = scmp.ne.s32.totalorder %s66, %s67
    %p76 = scmp.eq.s32.totalorder %s14, 0
    %p77 = por %p75, %p76
    %p78 = scmp.ne.s32.totalorder %s66, %s67
    %p79 = scmp.eq.s32.totalorder %s15, 1
    %p80 = por %p78, %p79
    %p82 = scmp.ne.s32.totalorder %s67, %s81
    %p83 = scmp.eq.s32.totalorder %s15, 0
    %p84 = por %p82, %p83
    %s85 = ssub.s32 %s9, %s16
    %p86 = scmp.eq.s32.totalorder %s85, 0
    %s88 = sadd.s32 %s87, 1
    %s89 = scalar_select %p86, %s87, %s88
    %p92 = pneg %p86
    %p93 = scmp.eq.s32.totalorder %s9, 1
    %p94 = por %p92, %p93
    %p95 = scmp.ne.s32.totalorder %s87, %s90
    %p96 = scmp.eq.s32.totalorder %s9, 0
    %p97 = por %p95, %p96
    %p98 = scmp.ne.s32.totalorder %s87, %s90
    %p99 = scmp.eq.s32.totalorder %s14, 1
    %p100 = por %p98, %p99
    %p101 = scmp.ne.s32.totalorder %s90, %s91
    %p102 = scmp.eq.s32.totalorder %s14, 0
    %p103 = por %p101, %p102
    %p104 = scmp.ne.s32.totalorder %s90, %s91
    %p105 = scmp.eq.s32.totalorder %s15, 1
    %p106 = por %p104, %p105
    %p108 = scmp.ne.s32.totalorder %s91, %s107
    %p109 = scmp.eq.s32.totalorder %s15, 0
    %p110 = por %p108, %p109
    %p111 = scmp.le.s32.totalorder 1, %s9
    %p112 = scmp.lt.s32.totalorder %s9, 3
    %p113 = pnand %p111, %p112
    %p114 = pneg %p113
    // Predicated region
    $region9: #{conv_cat_forward.1} parent=5 // pred_check
      _
    $region10: #{conv_cat_forward.1} parent=5 // pred_check_branch
      %116 = sbr.rel (%p113) target = $region12
    $region11: #{conv_cat_forward.1} parent=5 // pred_region
      %s117 = ssub.s32 %s9, 1
      // Predicated region
      $region13: #{conv_cat_forward.1} parent=11 // pred_check
        %p118 = pneg %p56
      $region14: #{conv_cat_forward.1} parent=11 // pred_check_branch
        %120 = sbr.rel (%p118) target = $region16
      $region15: #{conv_cat_forward.1} parent=11 // pred_region
        _
      $region16: #{conv_cat_forward.1} parent=11 // pred_fallthru
        _
      // Predicated region
      $region17: #{conv_cat_forward.1} parent=11 // pred_check
        %p121 = pneg %p77
      $region18: #{conv_cat_forward.1} parent=11 // pred_check_branch
        %123 = sbr.rel (%p121) target = $region20
      $region19: #{conv_cat_forward.1} parent=11 // pred_region
        _
      $region20: #{conv_cat_forward.1} parent=11 // pred_fallthru
        _
    $region12: #{conv_cat_forward.1} parent=5 // pred_fallthru
      _
    %p124 = scmp.lt.s32.totalorder %s9, 2
    // Predicated region
    $region21: #{conv_cat_forward.1} parent=5 // pred_check
      %p125 = pneg %p124
    $region22: #{conv_cat_forward.1} parent=5 // pred_check_branch
      %127 = sbr.rel (%p125) target = $region24
    $region23: #{conv_cat_forward.1} parent=5 // pred_region
      // Predicated region
      $region25: #{conv_cat_forward.1} parent=23 // pred_check
        %p128 = pneg %p29
      $region26: #{conv_cat_forward.1} parent=23 // pred_check_branch
        %130 = sbr.rel (%p128) target = $region28
      $region27: #{conv_cat_forward.1} parent=23 // pred_region
        %p131 = scmp.lt.s32.totalorder %s9, 1
        %s132 = scalar_select %p131, %s9, 1
        %s133 = smul.addr %s132, 3
        %s134 = smul.addr %s133, 4
        %s135 = scalar_lea.vmem %s0, %s134
      $region28: #{conv_cat_forward.1} parent=23 // pred_fallthru
        _
    $region24: #{conv_cat_forward.1} parent=5 // pred_fallthru
      _
    %p136 = scmp.le.s32.totalorder 1, %s9
    %p137 = scmp.lt.s32.totalorder %s9, 3
    %p138 = pnand %p136, %p137
    %p139 = pneg %p138
    // Predicated region
    $region29: #{conv_cat_forward.1} parent=5 // pred_check
      _
    $region30: #{conv_cat_forward.1} parent=5 // pred_check_branch
      %141 = sbr.rel (%p138) target = $region32
    $region31: #{conv_cat_forward.1} parent=5 // pred_region
      %s142 = ssub.s32 %s9, 1
      %p143 = scmp.lt.s32.totalorder %s14, 1
      %s144 = scalar_select %p143, %s14, 1
      %s145 = smul.addr %s144, 3
      %s146 = smul.addr %s145, 4
      %s147 = scalar_lea.vmem %s0, %s146
      %p148 = pneg %p35
      %p149 = pneg %p32
      %p150 = pneg %p56
      %p151 = pneg %p53
      %p152 = pneg %p77
      %p153 = pneg %p74
      %p154 = pneg %p103
      %p155 = pneg %p100
      %p156 = scmp.lt.s32.totalorder %s14, 1
      %s157 = scalar_select %p156, %s14, 1
      %s158 = smul.addr %s157, 4
      %s159 = smul.addr %s158, 8
      %s160 = scalar_lea.vmem %s3, %s159
      %p161 = scmp.lt.s32.totalorder %s14, 1
      %s162 = scalar_select %p161, %s14, 1
      %s163 = smul.addr %s162, 3
      %s164 = smul.addr %s163, 4
      %s165 = scalar_lea.vmem %s0, %s164
      %p166 = scmp.lt.s32.totalorder %s14, 1
      %s167 = scalar_select %p166, %s14, 1
      %s168 = smul.addr %s167, 4
      %s169 = smul.addr %s168, 8
      %s170 = scalar_lea.vmem %s3, %s169
      %v171 = vld [vmem:[%s165] sm:$0xff]
      %v172 = vld [vmem:[%s165 + $0x8] sm:$0xf]
      %v173 = vlaneseq
      %v174 = vand.u32 %v173, 127
      %v175 = vadd.s32 %v174, 128
      %vm176 = vcmp.lt.s32.totalorder %v174, 0
      %v177 = vsub.s32 0, %v174
      %v178 = vsel %vm176, %v177, %v174
      %v179 = vshrl.u32 %v178, 4
      %v180 = vand.u32 %v178, 15
      %v181 = vsub.s32 0, %v180
      %v182 = vsel %vm176, %v181, %v180
      %vm183 = vcmp.lt.s32.totalorder %v175, 0
      %v184 = vsub.s32 0, %v175
      %v185 = vsel %vm183, %v184, %v175
      %v186 = vshrl.u32 %v185, 4
      %v187 = vand.u32 %v185, 15
      %v188 = vsub.s32 0, %v187
      %v189 = vsel %vm183, %v188, %v187
      %vm190 = vcmp.ne.s32.totalorder %v182, 0
      %vm191 = vcmp.ne.s32.totalorder %v189, 0
      %vm192 = vcmp.lt.s32.totalorder %v182, 0
      %vm193 = vcmp.lt.s32.totalorder %v189, 0
      %vm194 = vmand %vm192, %vm190
      %vm195 = vmand %vm193, %vm191
      %v196 = vadd.s32 %v182, 16
      %v197 = vadd.s32 %v189, 16
      %v198 = vsel %vm194, %v196, %v182
      %v199 = vsel %vm195, %v197, %v189
      %v200 = vadd.s32 %v198, 4294967295
      %v201 = vadd.s32 %v199, 4294967295
      %vm202 = vcmp.ge.s32.totalorder %v200, 0
      %vm203 = vcmp.ge.s32.totalorder %v201, 0
      %vm204 = vcmp.lt.s32.totalorder %v200, 16
      %vm205 = vcmp.lt.s32.totalorder %v201, 16
      %vm206 = vmand %vm202, %vm204
      %vm207 = vmand %vm203, %vm205
      %v208 = vadd.s32 %v198, 1
      %v209 = vadd.s32 %v199, 1
      %vm210 = vcmp.ge.s32.totalorder %v208, 0
      %vm211 = vcmp.ge.s32.totalorder %v209, 0
      %vm212 = vcmp.lt.s32.totalorder %v208, 16
      %vm213 = vcmp.lt.s32.totalorder %v209, 16
      %vm214 = vmand %vm210, %vm212
      %vm215 = vmand %vm211, %vm213
      %v216 = vld [vmem:[%s2] sm:$0xff]
      %218 = vset.pattern.permute.xlu0 0
      %219 = vperm.xlu0 %218, %v216
      %v220 = vpop.permute.xlu0 %219
      %v222 = vsel %vm206, 1, 0
      %v223 = vsel %vm207, 1, 0
      %vm224 = vcmp.eq.s32.totalorder %v222, 1
      %vm225 = vcmp.eq.s32.totalorder %v223, 1
      %227 = vst [vmem:[#allocation1] ss:$2 sm:$0xff] %v171
      %v228 = vld.sshfl [vmem:[#allocation1] sm:$0xff pattern:$0x75316420]
      %v229 = vld.sshfl [vmem:[#allocation1 + $0x8] sm:$0xff pattern:$0x75316420]
      %v232 = vsel %vm224, %v228, 0.0
      %v233 = vsel %vm225, %v229, 0.0
      %v234 = vld [vmem:[%s1] sm:$0xff]
      %vm235 = vcmask 31744
      %v237 = vsel %vm235, %v234, 0
      %vm239 = vcmask 1043456
      %v241 = vsel %vm239, %v232, 0
      %v244 = vsel %vm239, %v233, 0
      %246 = vmatpush.msra.mxu0 0.0
      %247 = vmatpush.msra.mxu0 0.0
      %248 = vmatpush.msra.mxu0 0.0
      %249 = vmatpush.msra.mxu0 0.0
      %250 = vmatpush.msra.mxu0 0.0
      %251 = vmatpush.msra.mxu0 0.0
      %252 = vmatpush.msra.mxu0 0.0
      %253 = vmatpush.msra.mxu0 0.0
      %254 = vmatpush.msra.mxu0 0.0
      %255 = vmatpush.msra.mxu0 0.0
      %256 = vmatpush.msra.mxu0 0.0
      %257 = vmatpush.msra.mxu0 0.0
      %258 = vmatpush.msra.mxu0 0.0
      %259 = vmatpush.msra.mxu0 0.0
      %260 = vmatpush.msra.mxu0 0.0
      %261 = vmatpush.msra.mxu0 %v241
      %262 = vmatmul.f32.gmra.mxu0 %v237
      %v263 = vpop.f32.mrf.mxu0
      %v264 = vadd.f32 0.0, %v263
      %265 = vdwg.mxu0
      %266 = vmatpush.msra.mxu0 0.0
      %267 = vmatpush.msra.mxu0 0.0
      %268 = vmatpush.msra.mxu0 0.0
      %269 = vmatpush.msra.mxu0 0.0
      %270 = vmatpush.msra.mxu0 0.0
      %271 = vmatpush.msra.mxu0 0.0
      %272 = vmatpush.msra.mxu0 0.0
      %273 = vmatpush.msra.mxu0 0.0
      %274 = vmatpush.msra.mxu0 0.0
      %275 = vmatpush.msra.mxu0 0.0
      %276 = vmatpush.msra.mxu0 0.0
      %277 = vmatpush.msra.mxu0 0.0
      %278 = vmatpush.msra.mxu0 0.0
      %279 = vmatpush.msra.mxu0 0.0
      %280 = vmatpush.msra.mxu0 0.0
      %281 = vmatpush.msra.mxu0 %v244
      %282 = vmatmul.f32.gmra.mxu0 %v237
      %v283 = vpop.f32.mrf.mxu0
      %v284 = vadd.f32 0.0, %v283
      %285 = vdwg.mxu0
      %v286 = vadd.f32 %v220, %v264
      %v287 = vadd.f32 %v220, %v284
      %s288 = scalar_lea.vmem %s1, 8
      %v289 = vld [vmem:[%s288] sm:$0xff]
      %291 = vst [vmem:[#allocation1] ss:$2 sm:$0xff] %v171
      %s292 = scalar_lea.vmem [#allocation1], 16
      %293 = vst [vmem:[%s292] ss:$2 sm:$0xff] %v172
      %v294 = vld.sshfl [vmem:[#allocation1] sm:$0xff pattern:$0x75316420]
      %v295 = vld.sshfl [vmem:[#allocation1 + $0x8] sm:$0xff pattern:$0x75316420]
      %v296 = vld.sshfl [vmem:[#allocation1 + $0x10] sm:$0xff pattern:$0x75316420]
      %297 = vrot.lane.b32.xlu0 %v294, 127
      %v298 = vpop.permute.xlu0 %297
      %299 = vrot.lane.b32.xlu0 %v295, 127
      %v300 = vpop.permute.xlu0 %299
      %301 = vrot.lane.b32.xlu0 %v296, 127
      %v302 = vpop.permute.xlu0 %301
      %vm303 = vcmask 1039360
      %v304 = vsel %vm303, %v298, %v300
      %v305 = vsel %vm303, %v300, %v302
      %v307 = vsel %vm235, %v289, 0
      %v309 = vsel %vm239, %v304, 0
      %v311 = vsel %vm239, %v305, 0
      %313 = vmatpush.msra.mxu0 0.0
      %314 = vmatpush.msra.mxu0 0.0
      %315 = vmatpush.msra.mxu0 0.0
      %316 = vmatpush.msra.mxu0 0.0
      %317 = vmatpush.msra.mxu0 0.0
      %318 = vmatpush.msra.mxu0 0.0
      %319 = vmatpush.msra.mxu0 0.0
      %320 = vmatpush.msra.mxu0 0.0
      %321 = vmatpush.msra.mxu0 0.0
      %322 = vmatpush.msra.mxu0 0.0
      %323 = vmatpush.msra.mxu0 0.0
      %324 = vmatpush.msra.mxu0 0.0
      %325 = vmatpush.msra.mxu0 0.0
      %326 = vmatpush.msra.mxu0 0.0
      %327 = vmatpush.msra.mxu0 0.0
      %328 = vmatpush.msra.mxu0 %v309
      %329 = vmatmul.f32.gmra.mxu0 %v307
      %v330 = vpop.f32.mrf.mxu0
      %v331 = vadd.f32 0.0, %v330
      %332 = vdwg.mxu0
      %333 = vmatpush.msra.mxu0 0.0
      %334 = vmatpush.msra.mxu0 0.0
      %335 = vmatpush.msra.mxu0 0.0
      %336 = vmatpush.msra.mxu0 0.0
      %337 = vmatpush.msra.mxu0 0.0
      %338 = vmatpush.msra.mxu0 0.0
      %339 = vmatpush.msra.mxu0 0.0
      %340 = vmatpush.msra.mxu0 0.0
      %341 = vmatpush.msra.mxu0 0.0
      %342 = vmatpush.msra.mxu0 0.0
      %343 = vmatpush.msra.mxu0 0.0
      %344 = vmatpush.msra.mxu0 0.0
      %345 = vmatpush.msra.mxu0 0.0
      %346 = vmatpush.msra.mxu0 0.0
      %347 = vmatpush.msra.mxu0 0.0
      %348 = vmatpush.msra.mxu0 %v311
      %349 = vmatmul.f32.gmra.mxu0 %v307
      %v350 = vpop.f32.mrf.mxu0
      %v351 = vadd.f32 0.0, %v350
      %352 = vdwg.mxu0
      %v353 = vadd.f32 %v286, %v331
      %v354 = vadd.f32 %v287, %v351
      %v355 = vsel %vm214, 1, 0
      %v356 = vsel %vm215, 1, 0
      %vm357 = vcmp.eq.s32.totalorder %v355, 1
      %vm358 = vcmp.eq.s32.totalorder %v356, 1
      %359 = vst [vmem:[#allocation1] ss:$2 sm:$0xff] %v171
      %s360 = scalar_lea.vmem [#allocation1], 16
      %361 = vst [vmem:[%s360] ss:$2 sm:$0xff] %v172
      %v362 = vld.sshfl [vmem:[#allocation1] sm:$0xff pattern:$0x75316420]
      %v363 = vld.sshfl [vmem:[#allocation1 + $0x8] sm:$0xff pattern:$0x75316420]
      %v364 = vld.sshfl [vmem:[#allocation1 + $0x10] sm:$0xff pattern:$0x75316420]
      %365 = vrot.lane.b32.xlu0 %v362, 126
      %v366 = vpop.permute.xlu0 %365
      %367 = vrot.lane.b32.xlu0 %v363, 126
      %v368 = vpop.permute.xlu0 %367
      %369 = vrot.lane.b32.xlu0 %v364, 126
      %v370 = vpop.permute.xlu0 %369
      %vm371 = vcmask 1031168
      %v372 = vsel %vm371, %v366, %v368
      %v373 = vsel %vm371, %v368, %v370
      %v376 = vsel %vm357, %v372, 0.0
      %v377 = vsel %vm358, %v373, 0.0
      %s378 = scalar_lea.vmem %s1, 16
      %v379 = vld [vmem:[%s378] sm:$0xff]
      %v381 = vsel %vm235, %v379, 0
      %v384 = vsel %vm239, %v376, 0
      %v387 = vsel %vm239, %v377, 0
      %389 = vmatpush.msra.mxu0 0.0
      %390 = vmatpush.msra.mxu0 0.0
      %391 = vmatpush.msra.mxu0 0.0
      %392 = vmatpush.msra.mxu0 0.0
      %393 = vmatpush.msra.mxu0 0.0
      %394 = vmatpush.msra.mxu0 0.0
      %395 = vmatpush.msra.mxu0 0.0
      %396 = vmatpush.msra.mxu0 0.0
      %397 = vmatpush.msra.mxu0 0.0
      %398 = vmatpush.msra.mxu0 0.0
      %399 = vmatpush.msra.mxu0 0.0
      %400 = vmatpush.msra.mxu0 0.0
      %401 = vmatpush.msra.mxu0 0.0
      %402 = vmatpush.msra.mxu0 0.0
      %403 = vmatpush.msra.mxu0 0.0
      %404 = vmatpush.msra.mxu0 %v384
      %405 = vmatmul.f32.gmra.mxu0 %v381
      %v406 = vpop.f32.mrf.mxu0
      %v407 = vadd.f32 0.0, %v406
      %408 = vdwg.mxu0
      %409 = vmatpush.msra.mxu0 0.0
      %410 = vmatpush.msra.mxu0 0.0
      %411 = vmatpush.msra.mxu0 0.0
      %412 = vmatpush.msra.mxu0 0.0
      %413 = vmatpush.msra.mxu0 0.0
      %414 = vmatpush.msra.mxu0 0.0
      %415 = vmatpush.msra.mxu0 0.0
      %416 = vmatpush.msra.mxu0 0.0
      %417 = vmatpush.msra.mxu0 0.0
      %418 = vmatpush.msra.mxu0 0.0
      %419 = vmatpush.msra.mxu0 0.0
      %420 = vmatpush.msra.mxu0 0.0
      %421 = vmatpush.msra.mxu0 0.0
      %422 = vmatpush.msra.mxu0 0.0
      %423 = vmatpush.msra.mxu0 0.0
      %424 = vmatpush.msra.mxu0 %v387
      %425 = vmatmul.f32.gmra.mxu0 %v381
      %v426 = vpop.f32.mrf.mxu0
      %v427 = vadd.f32 0.0, %v426
      %428 = vdwg.mxu0
      %v429 = vadd.f32 %v353, %v407
      %v430 = vadd.f32 %v354, %v427
      %431 = vst [vmem:[#allocation1] ss:$2 sm:$0xff] %v171
      %s432 = scalar_lea.vmem [#allocation1], 16
      %433 = vst [vmem:[%s432] ss:$2 sm:$0xff] %v172
      %v434 = vld.sshfl [vmem:[#allocation1] sm:$0xff pattern:$0x75316420]
      %v435 = vld.sshfl [vmem:[#allocation1 + $0x8] sm:$0xff pattern:$0x75316420]
      %v436 = vld.sshfl [vmem:[#allocation1 + $0x10] sm:$0xff pattern:$0x75316420]
      %437 = vrot.lane.b32.xlu0 %v434, 112
      %v438 = vpop.permute.xlu0 %437
      %439 = vrot.lane.b32.xlu0 %v435, 112
      %v440 = vpop.permute.xlu0 %439
      %441 = vrot.lane.b32.xlu0 %v436, 112
      %v442 = vpop.permute.xlu0 %441
      %vm443 = vcmask 916480
      %v444 = vsel %vm443, %v438, %v440
      %v445 = vsel %vm443, %v440, %v442
      %v448 = vsel %vm224, %v444, 0.0
      %v449 = vsel %vm225, %v445, 0.0
      %s450 = scalar_lea.vmem %s1, 24
      %v451 = vld [vmem:[%s450] sm:$0xff]
      %v453 = vsel %vm235, %v451, 0
      %v456 = vsel %vm239, %v448, 0
      %v459 = vsel %vm239, %v449, 0
      %461 = vmatpush.msra.mxu0 0.0
      %462 = vmatpush.msra.mxu0 0.0
      %463 = vmatpush.msra.mxu0 0.0
      %464 = vmatpush.msra.mxu0 0.0
      %465 = vmatpush.msra.mxu0 0.0
      %466 = vmatpush.msra.mxu0 0.0
      %467 = vmatpush.msra.mxu0 0.0
      %468 = vmatpush.msra.mxu0 0.0
      %469 = vmatpush.msra.mxu0 0.0
      %470 = vmatpush.msra.mxu0 0.0
      %471 = vmatpush.msra.mxu0 0.0
      %472 = vmatpush.msra.mxu0 0.0
      %473 = vmatpush.msra.mxu0 0.0
      %474 = vmatpush.msra.mxu0 0.0
      %475 = vmatpush.msra.mxu0 0.0
      %476 = vmatpush.msra.mxu0 %v456
      %477 = vmatmul.f32.gmra.mxu0 %v453
      %v478 = vpop.f32.mrf.mxu0
      %v479 = vadd.f32 0.0, %v478
      %480 = vdwg.mxu0
      %481 = vmatpush.msra.mxu0 0.0
      %482 = vmatpush.msra.mxu0 0.0
      %483 = vmatpush.msra.mxu0 0.0
      %484 = vmatpush.msra.mxu0 0.0
      %485 = vmatpush.msra.mxu0 0.0
      %486 = vmatpush.msra.mxu0 0.0
      %487 = vmatpush.msra.mxu0 0.0
      %488 = vmatpush.msra.mxu0 0.0
      %489 = vmatpush.msra.mxu0 0.0
      %490 = vmatpush.msra.mxu0 0.0
      %491 = vmatpush.msra.mxu0 0.0
      %492 = vmatpush.msra.mxu0 0.0
      %493 = vmatpush.msra.mxu0 0.0
      %494 = vmatpush.msra.mxu0 0.0
      %495 = vmatpush.msra.mxu0 0.0
      %496 = vmatpush.msra.mxu0 %v459
      %497 = vmatmul.f32.gmra.mxu0 %v453
      %v498 = vpop.f32.mrf.mxu0
      %v499 = vadd.f32 0.0, %v498
      %500 = vdwg.mxu0
      %v501 = vadd.f32 %v429, %v479
      %v502 = vadd.f32 %v430, %v499
      %s503 = scalar_lea.vmem %s1, 32
      %v504 = vld [vmem:[%s503] sm:$0xff]
      %505 = vst [vmem:[#allocation1] ss:$2 sm:$0xff] %v171
      %s506 = scalar_lea.vmem [#allocation1], 16
      %507 = vst [vmem:[%s506] ss:$2 sm:$0xff] %v172
      %v508 = vld.sshfl [vmem:[#allocation1] sm:$0xff pattern:$0x75316420]
      %v509 = vld.sshfl [vmem:[#allocation1 + $0x8] sm:$0xff pattern:$0x75316420]
      %v510 = vld.sshfl [vmem:[#allocation1 + $0x10] sm:$0xff pattern:$0x75316420]
      %511 = vrot.lane.b32.xlu0 %v508, 111
      %v512 = vpop.permute.xlu0 %511
      %513 = vrot.lane.b32.xlu0 %v509, 111
      %v514 = vpop.permute.xlu0 %513
      %515 = vrot.lane.b32.xlu0 %v510, 111
      %v516 = vpop.permute.xlu0 %515
      %vm517 = vcmask 908288
      %v518 = vsel %vm517, %v512, %v514
      %v519 = vsel %vm517, %v514, %v516
      %v521 = vsel %vm235, %v504, 0
      %v523 = vsel %vm239, %v518, 0
      %v525 = vsel %vm239, %v519, 0
      %527 = vmatpush.msra.mxu0 0.0
      %528 = vmatpush.msra.mxu0 0.0
      %529 = vmatpush.msra.mxu0 0.0
      %530 = vmatpush.msra.mxu0 0.0
      %531 = vmatpush.msra.mxu0 0.0
      %532 = vmatpush.msra.mxu0 0.0
      %533 = vmatpush.msra.mxu0 0.0
      %534 = vmatpush.msra.mxu0 0.0
      %535 = vmatpush.msra.mxu0 0.0
      %536 = vmatpush.msra.mxu0 0.0
      %537 = vmatpush.msra.mxu0 0.0
      %538 = vmatpush.msra.mxu0 0.0
      %539 = vmatpush.msra.mxu0 0.0
      %540 = vmatpush.msra.mxu0 0.0
      %541 = vmatpush.msra.mxu0 0.0
      %542 = vmatpush.msra.mxu0 %v523
      %543 = vmatmul.f32.gmra.mxu0 %v521
      %v544 = vpop.f32.mrf.mxu0
      %v545 = vadd.f32 0.0, %v544
      %546 = vdwg.mxu0
      %547 = vmatpush.msra.mxu0 0.0
      %548 = vmatpush.msra.mxu0 0.0
      %549 = vmatpush.msra.mxu0 0.0
      %550 = vmatpush.msra.mxu0 0.0
      %551 = vmatpush.msra.mxu0 0.0
      %552 = vmatpush.msra.mxu0 0.0
      %553 = vmatpush.msra.mxu0 0.0
      %554 = vmatpush.msra.mxu0 0.0
      %555 = vmatpush.msra.mxu0 0.0
      %556 = vmatpush.msra.mxu0 0.0
      %557 = vmatpush.msra.mxu0 0.0
      %558 = vmatpush.msra.mxu0 0.0
      %559 = vmatpush.msra.mxu0 0.0
      %560 = vmatpush.msra.mxu0 0.0
      %561 = vmatpush.msra.mxu0 0.0
      %562 = vmatpush.msra.mxu0 %v525
      %563 = vmatmul.f32.gmra.mxu0 %v521
      %v564 = vpop.f32.mrf.mxu0
      %v565 = vadd.f32 0.0, %v564
      %566 = vdwg.mxu0
      %v567 = vadd.f32 %v501, %v545
      %v568 = vadd.f32 %v502, %v565
      %569 = vst [vmem:[#allocation1] ss:$2 sm:$0xff] %v171
      %s570 = scalar_lea.vmem [#allocation1], 16
      %571 = vst [vmem:[%s570] ss:$2 sm:$0xff] %v172
      %v572 = vld.sshfl [vmem:[#allocation1] sm:$0xff pattern:$0x75316420]
      %v573 = vld.sshfl [vmem:[#allocation1 + $0x8] sm:$0xff pattern:$0x75316420]
      %v574 = vld.sshfl [vmem:[#allocation1 + $0x10] sm:$0xff pattern:$0x75316420]
      %575 = vrot.lane.b32.xlu0 %v572, 110
      %v576 = vpop.permute.xlu0 %575
      %577 = vrot.lane.b32.xlu0 %v573, 110
      %v578 = vpop.permute.xlu0 %577
      %579 = vrot.lane.b32.xlu0 %v574, 110
      %v580 = vpop.permute.xlu0 %579
      %vm581 = vcmask 900096
      %v582 = vsel %vm581, %v576, %v578
      %v583 = vsel %vm581, %v578, %v580
      %v586 = vsel %vm357, %v582, 0.0
      %v587 = vsel %vm358, %v583, 0.0
      %s588 = scalar_lea.vmem %s1, 40
      %v589 = vld [vmem:[%s588] sm:$0xff]
      %v591 = vsel %vm235, %v589, 0
      %v594 = vsel %vm239, %v586, 0
      %v597 = vsel %vm239, %v587, 0
      %599 = vmatpush.msra.mxu0 0.0
      %600 = vmatpush.msra.mxu0 0.0
      %601 = vmatpush.msra.mxu0 0.0
      %602 = vmatpush.msra.mxu0 0.0
      %603 = vmatpush.msra.mxu0 0.0
      %604 = vmatpush.msra.mxu0 0.0
      %605 = vmatpush.msra.mxu0 0.0
      %606 = vmatpush.msra.mxu0 0.0
      %607 = vmatpush.msra.mxu0 0.0
      %608 = vmatpush.msra.mxu0 0.0
      %609 = vmatpush.msra.mxu0 0.0
      %610 = vmatpush.msra.mxu0 0.0
      %611 = vmatpush.msra.mxu0 0.0
      %612 = vmatpush.msra.mxu0 0.0
      %613 = vmatpush.msra.mxu0 0.0
      %614 = vmatpush.msra.mxu0 %v594
      %615 = vmatmul.f32.gmra.mxu0 %v591
      %v616 = vpop.f32.mrf.mxu0
      %v617 = vadd.f32 0.0, %v616
      %618 = vdwg.mxu0
      %619 = vmatpush.msra.mxu0 0.0
      %620 = vmatpush.msra.mxu0 0.0
      %621 = vmatpush.msra.mxu0 0.0
      %622 = vmatpush.msra.mxu0 0.0
      %623 = vmatpush.msra.mxu0 0.0
      %624 = vmatpush.msra.mxu0 0.0
      %625 = vmatpush.msra.mxu0 0.0
      %626 = vmatpush.msra.mxu0 0.0
      %627 = vmatpush.msra.mxu0 0.0
      %628 = vmatpush.msra.mxu0 0.0
      %629 = vmatpush.msra.mxu0 0.0
      %630 = vmatpush.msra.mxu0 0.0
      %631 = vmatpush.msra.mxu0 0.0
      %632 = vmatpush.msra.mxu0 0.0
      %633 = vmatpush.msra.mxu0 0.0
      %634 = vmatpush.msra.mxu0 %v597
      %635 = vmatmul.f32.gmra.mxu0 %v591
      %v636 = vpop.f32.mrf.mxu0
      %v637 = vadd.f32 0.0, %v636
      %638 = vdwg.mxu0
      %v639 = vadd.f32 %v567, %v617
      %v640 = vadd.f32 %v568, %v637
      %641 = vst [vmem:[#allocation1] ss:$2 sm:$0xff] %v171
      %s642 = scalar_lea.vmem [#allocation1], 16
      %643 = vst [vmem:[%s642] ss:$2 sm:$0xff] %v172
      %v644 = vld.sshfl [vmem:[#allocation1] sm:$0xff pattern:$0x75316420]
      %v645 = vld.sshfl [vmem:[#allocation1 + $0x8] sm:$0xff pattern:$0x75316420]
      %v646 = vld.sshfl [vmem:[#allocation1 + $0x10] sm:$0xff pattern:$0x75316420]
      %647 = vrot.lane.b32.xlu0 %v644, 96
      %v648 = vpop.permute.xlu0 %647
      %649 = vrot.lane.b32.xlu0 %v645, 96
      %v650 = vpop.permute.xlu0 %649
      %651 = vrot.lane.b32.xlu0 %v646, 96
      %v652 = vpop.permute.xlu0 %651
      %vm653 = vcmask 785408
      %v654 = vsel %vm653, %v648, %v650
      %v655 = vsel %vm653, %v650, %v652
      %v658 = vsel %vm224, %v654, 0.0
      %v659 = vsel %vm225, %v655, 0.0
      %s660 = scalar_lea.vmem %s1, 48
      %v661 = vld [vmem:[%s660] sm:$0xff]
      %v663 = vsel %vm235, %v661, 0
      %v666 = vsel %vm239, %v658, 0
      %v669 = vsel %vm239, %v659, 0
      %671 = vmatpush.msra.mxu0 0.0
      %672 = vmatpush.msra.mxu0 0.0
      %673 = vmatpush.msra.mxu0 0.0
      %674 = vmatpush.msra.mxu0 0.0
      %675 = vmatpush.msra.mxu0 0.0
      %676 = vmatpush.msra.mxu0 0.0
      %677 = vmatpush.msra.mxu0 0.0
      %678 = vmatpush.msra.mxu0 0.0
      %679 = vmatpush.msra.mxu0 0.0
      %680 = vmatpush.msra.mxu0 0.0
      %681 = vmatpush.msra.mxu0 0.0
      %682 = vmatpush.msra.mxu0 0.0
      %683 = vmatpush.msra.mxu0 0.0
      %684 = vmatpush.msra.mxu0 0.0
      %685 = vmatpush.msra.mxu0 0.0
      %686 = vmatpush.msra.mxu0 %v666
      %687 = vmatmul.f32.gmra.mxu0 %v663
      %v688 = vpop.f32.mrf.mxu0
      %v689 = vadd.f32 0.0, %v688
      %690 = vdwg.mxu0
      %691 = vmatpush.msra.mxu0 0.0
      %692 = vmatpush.msra.mxu0 0.0
      %693 = vmatpush.msra.mxu0 0.0
      %694 = vmatpush.msra.mxu0 0.0
      %695 = vmatpush.msra.mxu0 0.0
      %696 = vmatpush.msra.mxu0 0.0
      %697 = vmatpush.msra.mxu0 0.0
      %698 = vmatpush.msra.mxu0 0.0
      %699 = vmatpush.msra.mxu0 0.0
      %700 = vmatpush.msra.mxu0 0.0
      %701 = vmatpush.msra.mxu0 0.0
      %702 = vmatpush.msra.mxu0 0.0
      %703 = vmatpush.msra.mxu0 0.0
      %704 = vmatpush.msra.mxu0 0.0
      %705 = vmatpush.msra.mxu0 0.0
      %706 = vmatpush.msra.mxu0 %v669
      %707 = vmatmul.f32.gmra.mxu0 %v663
      %v708 = vpop.f32.mrf.mxu0
      %v709 = vadd.f32 0.0, %v708
      %710 = vdwg.mxu0
      %v711 = vadd.f32 %v639, %v689
      %v712 = vadd.f32 %v640, %v709
      %s713 = scalar_lea.vmem %s1, 56
      %v714 = vld [vmem:[%s713] sm:$0xff]
      %715 = vst [vmem:[#allocation1] ss:$2 sm:$0xff] %v171
      %s716 = scalar_lea.vmem [#allocation1], 16
      %717 = vst [vmem:[%s716] ss:$2 sm:$0xff] %v172
      %v718 = vld.sshfl [vmem:[#allocation1] sm:$0xff pattern:$0x75316420]
      %v719 = vld.sshfl [vmem:[#allocation1 + $0x8] sm:$0xff pattern:$0x75316420]
      %v720 = vld.sshfl [vmem:[#allocation1 + $0x10] sm:$0xff pattern:$0x75316420]
      %721 = vrot.lane.b32.xlu0 %v718, 95
      %v722 = vpop.permute.xlu0 %721
      %723 = vrot.lane.b32.xlu0 %v719, 95
      %v724 = vpop.permute.xlu0 %723
      %725 = vrot.lane.b32.xlu0 %v720, 95
      %v726 = vpop.permute.xlu0 %725
      %vm727 = vcmask 777216
      %v728 = vsel %vm727, %v722, %v724
      %v729 = vsel %vm727, %v724, %v726
      %v731 = vsel %vm235, %v714, 0
      %v733 = vsel %vm239, %v728, 0
      %v735 = vsel %vm239, %v729, 0
      %737 = vmatpush.msra.mxu0 0.0
      %738 = vmatpush.msra.mxu0 0.0
      %739 = vmatpush.msra.mxu0 0.0
      %740 = vmatpush.msra.mxu0 0.0
      %741 = vmatpush.msra.mxu0 0.0
      %742 = vmatpush.msra.mxu0 0.0
      %743 = vmatpush.msra.mxu0 0.0
      %744 = vmatpush.msra.mxu0 0.0
      %745 = vmatpush.msra.mxu0 0.0
      %746 = vmatpush.msra.mxu0 0.0
      %747 = vmatpush.msra.mxu0 0.0
      %748 = vmatpush.msra.mxu0 0.0
      %749 = vmatpush.msra.mxu0 0.0
      %750 = vmatpush.msra.mxu0 0.0
      %751 = vmatpush.msra.mxu0 0.0
      %752 = vmatpush.msra.mxu0 %v733
      %753 = vmatmul.f32.gmra.mxu0 %v731
      %v754 = vpop.f32.mrf.mxu0
      %v755 = vadd.f32 0.0, %v754
      %756 = vdwg.mxu0
      %757 = vmatpush.msra.mxu0 0.0
      %758 = vmatpush.msra.mxu0 0.0
      %759 = vmatpush.msra.mxu0 0.0
      %760 = vmatpush.msra.mxu0 0.0
      %761 = vmatpush.msra.mxu0 0.0
      %762 = vmatpush.msra.mxu0 0.0
      %763 = vmatpush.msra.mxu0 0.0
      %764 = vmatpush.msra.mxu0 0.0
      %765 = vmatpush.msra.mxu0 0.0
      %766 = vmatpush.msra.mxu0 0.0
      %767 = vmatpush.msra.mxu0 0.0
      %768 = vmatpush.msra.mxu0 0.0
      %769 = vmatpush.msra.mxu0 0.0
      %770 = vmatpush.msra.mxu0 0.0
      %771 = vmatpush.msra.mxu0 0.0
      %772 = vmatpush.msra.mxu0 %v735
      %773 = vmatmul.f32.gmra.mxu0 %v731
      %v774 = vpop.f32.mrf.mxu0
      %v775 = vadd.f32 0.0, %v774
      %776 = vdwg.mxu0
      %v777 = vadd.f32 %v711, %v755
      %v778 = vadd.f32 %v712, %v775
      %779 = vst [vmem:[#allocation1] ss:$2 sm:$0xff] %v171
      %s780 = scalar_lea.vmem [#allocation1], 16
      %781 = vst [vmem:[%s780] ss:$2 sm:$0xff] %v172
      %v782 = vld.sshfl [vmem:[#allocation1] sm:$0xff pattern:$0x75316420]
      %v783 = vld.sshfl [vmem:[#allocation1 + $0x8] sm:$0xff pattern:$0x75316420]
      %v784 = vld.sshfl [vmem:[#allocation1 + $0x10] sm:$0xff pattern:$0x75316420]
      %785 = vrot.lane.b32.xlu0 %v782, 94
      %v786 = vpop.permute.xlu0 %785
      %787 = vrot.lane.b32.xlu0 %v783, 94
      %v788 = vpop.permute.xlu0 %787
      %789 = vrot.lane.b32.xlu0 %v784, 94
      %v790 = vpop.permute.xlu0 %789
      %vm791 = vcmask 769024
      %v792 = vsel %vm791, %v786, %v788
      %v793 = vsel %vm791, %v788, %v790
      %v796 = vsel %vm357, %v792, 0.0
      %v797 = vsel %vm358, %v793, 0.0
      %s798 = scalar_lea.vmem %s1, 64
      %v799 = vld [vmem:[%s798] sm:$0xff]
      %v801 = vsel %vm235, %v799, 0
      %v804 = vsel %vm239, %v796, 0
      %v807 = vsel %vm239, %v797, 0
      %809 = vmatpush.msra.mxu0 0.0
      %810 = vmatpush.msra.mxu0 0.0
      %811 = vmatpush.msra.mxu0 0.0
      %812 = vmatpush.msra.mxu0 0.0
      %813 = vmatpush.msra.mxu0 0.0
      %814 = vmatpush.msra.mxu0 0.0
      %815 = vmatpush.msra.mxu0 0.0
      %816 = vmatpush.msra.mxu0 0.0
      %817 = vmatpush.msra.mxu0 0.0
      %818 = vmatpush.msra.mxu0 0.0
      %819 = vmatpush.msra.mxu0 0.0
      %820 = vmatpush.msra.mxu0 0.0
      %821 = vmatpush.msra.mxu0 0.0
      %822 = vmatpush.msra.mxu0 0.0
      %823 = vmatpush.msra.mxu0 0.0
      %824 = vmatpush.msra.mxu0 %v804
      %825 = vmatmul.f32.gmra.mxu0 %v801
      %v826 = vpop.f32.mrf.mxu0
      %v827 = vadd.f32 0.0, %v826
      %828 = vdwg.mxu0
      %829 = vmatpush.msra.mxu0 0.0
      %830 = vmatpush.msra.mxu0 0.0
      %831 = vmatpush.msra.mxu0 0.0
      %832 = vmatpush.msra.mxu0 0.0
      %833 = vmatpush.msra.mxu0 0.0
      %834 = vmatpush.msra.mxu0 0.0
      %835 = vmatpush.msra.mxu0 0.0
      %836 = vmatpush.msra.mxu0 0.0
      %837 = vmatpush.msra.mxu0 0.0
      %838 = vmatpush.msra.mxu0 0.0
      %839 = vmatpush.msra.mxu0 0.0
      %840 = vmatpush.msra.mxu0 0.0
      %841 = vmatpush.msra.mxu0 0.0
      %842 = vmatpush.msra.mxu0 0.0
      %843 = vmatpush.msra.mxu0 0.0
      %844 = vmatpush.msra.mxu0 %v807
      %845 = vmatmul.f32.gmra.mxu0 %v801
      %v846 = vpop.f32.mrf.mxu0
      %v847 = vadd.f32 0.0, %v846
      %848 = vdwg.mxu0
      %v849 = vadd.f32 %v777, %v827
      %v850 = vadd.f32 %v778, %v847
      %v851 = vmax.f32 %v849, 0.0
      %v852 = vmax.f32 %v850, 0.0
      %853 = vst [vmem:[#allocation1] ss:$2 sm:$0xff] %v171
      %s854 = scalar_lea.vmem [#allocation1], 16
      %855 = vst [vmem:[%s854] ss:$2 sm:$0xff] %v172
      %v856 = vld.sshfl [vmem:[#allocation1] sm:$0xff pattern:$0x75316420]
      %v857 = vld.sshfl [vmem:[#allocation1 + $0x8] sm:$0xff pattern:$0x75316420]
      %v858 = vld.sshfl [vmem:[#allocation1 + $0x10] sm:$0xff pattern:$0x75316420]
      %859 = vrot.lane.b32.xlu0 %v856, 111
      %v860 = vpop.permute.xlu0 %859
      %861 = vrot.lane.b32.xlu0 %v857, 111
      %v862 = vpop.permute.xlu0 %861
      %863 = vrot.lane.b32.xlu0 %v858, 111
      %v864 = vpop.permute.xlu0 %863
      %v865 = vsel %vm517, %v860, %v862
      %v866 = vsel %vm517, %v862, %v864
      %869 = vst [vmem:[%s170] sm:$0xf] %v865
      %870 = vst [vmem:[%s170 + $0x8] sm:$0xf] %v866
      %v873 = vrot.slane %v851, 4
      %v874 = vrot.slane %v852, 4
      %877 = vst [vmem:[%s170] sm:$0xf0] %v873
      %878 = vst [vmem:[%s170 + $0x8] sm:$0xf0] %v874
      %879 = vst [vmem:[%s170 + $0x10] sm:$0xf] %v873
      %880 = vst [vmem:[%s170 + $0x18] sm:$0xf] %v874
      %p881 = scmp.lt.s32.totalorder %s14, 1
      %s882 = scalar_select %p881, %s14, 1
      %s883 = smul.addr %s882, 4
      %s884 = smul.addr %s883, 8
      %s885 = scalar_lea.vmem %s3, %s884
      // Predicated region
      $region33: #{conv_cat_forward.1} parent=31 // pred_check
        %p886 = pneg %p100
      $region34: #{conv_cat_forward.1} parent=31 // pred_check_branch
        %888 = sbr.rel (%p886) target = $region36
      $region35: #{conv_cat_forward.1} parent=31 // pred_region
        _
      $region36: #{conv_cat_forward.1} parent=31 // pred_fallthru
        _
    $region32: #{conv_cat_forward.1} parent=5 // pred_fallthru
      _
    %p889 = scmp.le.s32.totalorder 2, %s9
    // Predicated region
    $region37: #{conv_cat_forward.1} parent=5 // pred_check
      %p890 = pneg %p889
    $region38: #{conv_cat_forward.1} parent=5 // pred_check_branch
      %892 = sbr.rel (%p890) target = $region40
    $region39: #{conv_cat_forward.1} parent=5 // pred_region
      %s893 = ssub.s32 %s9, 2
      // Predicated region
      $region41: #{conv_cat_forward.1} parent=39 // pred_check
        %p894 = pneg %p106
      $region42: #{conv_cat_forward.1} parent=39 // pred_check_branch
        %896 = sbr.rel (%p894) target = $region44
      $region43: #{conv_cat_forward.1} parent=39 // pred_region
        %p897 = scmp.lt.s32.totalorder %s15, 1
        %s898 = scalar_select %p897, %s15, 1
        %s899 = smul.addr %s898, 4
        %s900 = smul.addr %s899, 8
        %s901 = scalar_lea.vmem %s3, %s900
      $region44: #{conv_cat_forward.1} parent=39 // pred_fallthru
        _
    $region40: #{conv_cat_forward.1} parent=5 // pred_fallthru
      _
  $region6: #{conv_cat_forward.1} parent=0 // loop_footer
    %s13 = sadd.s32 1, %s9
  $region7: #{conv_cat_forward.1} parent=0 // loop_footer_branch
    %8 = sbr.rel target = $region3
  $region8: #{conv_cat_forward.1} parent=0 // loop_exit
    _

</llo_original>
